<compile_context>
chip_gen: v7x
topology: tpu7x:2x2x1
jax: 0.10.0
libtpu: 0.0.40
codegen_flags: <defaults>
</compile_context>

<pallas_src>
import functools
import math

import jax
import jax.numpy as jnp
from jax.experimental import pallas as pl
from jax.experimental.pallas import tpu as pltpu

_INV_SQRT2 = 0.7071067811865476
_SQRT_2_OVER_PI = 0.7978845608028654


def _round_up(x, m):
    return ((x + m - 1) // m) * m


def _bert_intermediate_kernel(x_ref, w_ref, b_ref, o_ref, *, compute_dtype,
                              approximate):
    # x_ref: (tm, H) input dtype; w_ref: (H, tn) compute dtype;
    # b_ref: (1, tn) f32; o_ref: (tm, tn) out dtype.
    x = x_ref[...].astype(compute_dtype)          # in-kernel cast (X read from
    acc = jnp.dot(x, w_ref[...],                  # HBM once, original dtype)
                  preferred_element_type=jnp.float32)
    acc = acc + b_ref[...]                        # bias broadcast, f32
    if approximate:
        # tanh GELU (EUP-friendly) — opt-in only, changes numerics slightly.
        inner = _SQRT_2_OVER_PI * (acc + 0.044715 * acc * acc * acc)
        y = 0.5 * acc * (1.0 + jnp.tanh(inner))
    else:
        # Exact erf GELU — matches torch.nn.functional.gelu default.
        y = 0.5 * acc * (1.0 + jax.lax.erf(acc * _INV_SQRT2))
    o_ref[...] = y.astype(o_ref.dtype)


def _vmem_cap_bytes():
    """Per-generation scoped-VMEM cap (bytes)."""
    try:
        info = pltpu.get_tpu_info()
        phys = int(getattr(info, "vmem_capacity_bytes", 64 << 20))
    except Exception:
        phys = 64 << 20                   # be conservative (v7x-sized VMEM)
    if phys >= (100 << 20):               # v5e / v6e: 128 MiB physical VMEM
        return 96 << 20
    return 44 << 20                       # v7x: 64 MiB physical VMEM


def bert_intermediate(hidden_states, weight, bias, *,
                      compute_dtype=jnp.bfloat16, out_dtype=None,
                      approximate=False, max_tm=1024):
    """hidden_states: [B, S, H]; weight: [H, I] (transpose of torch Linear
    weight); bias: [I] -> gelu(hidden_states @ weight + bias): [B, S, I]."""
    B, S, H = hidden_states.shape
    Hw, I = weight.shape
    assert Hw == H, "weight must be [hidden_size, intermediate_size]"
    M = B * S
    if out_dtype is None:
        out_dtype = hidden_states.dtype

    x_itemsize = jnp.dtype(hidden_states.dtype).itemsize
    w_itemsize = jnp.dtype(compute_dtype).itemsize
    out_itemsize = jnp.dtype(out_dtype).itemsize

    cap = _vmem_cap_bytes()
    budget = cap - (4 << 20)              # leave headroom under the limit
    I_pad128 = _round_up(I, 128)

    x2d = hidden_states.reshape(M, H)                 # no wrapper-side cast
    w = weight.astype(compute_dtype)
    b2d = bias.astype(jnp.float32).reshape(1, I)

    kernel = functools.partial(_bert_intermediate_kernel,
                               compute_dtype=compute_dtype,
                               approximate=approximate)

    def run(single_buffer_w):
        # ---------------- tile selection (VMEM-budget driven) ----------------
        w_res_bytes = (1 if single_buffer_w else 2) * H * I_pad128 * w_itemsize
        resident = w_res_bytes <= budget // 2
        if resident:
            tn = I_pad = I_pad128
            w_vmem = w_res_bytes
        else:
            tn = 512
            I_pad = _round_up(I, tn)
            w_vmem = 2 * H * tn * w_itemsize          # streamed column tiles
        bias_vmem = 2 * tn * 4
        per_row = (2 * H * x_itemsize                 # X block, double-buffered
                   + H * w_itemsize                   # in-kernel bf16 X copy
                   + 2 * tn * out_itemsize            # output block, dbl-buf
                   + 3 * tn * 4)                      # f32 acc + erf temps
        tm = max(8, int((budget - w_vmem - bias_vmem) // per_row))
        tm = min(tm, max_tm)
        ALIGN = 256                                   # MXU-friendly everywhere
        tm = (tm // ALIGN) * ALIGN if tm >= ALIGN else (tm // 8) * 8
        tm = max(tm, 8)
        m8 = _round_up(M, 8)
        if tm >= m8:
            # Keep >= 2 row blocks when possible so both v7x TCs get work.
            tm = _round_up((m8 + 1) // 2, 8) if m8 >= 16 else m8
        M_pad = _round_up(M, tm)
        grid_m = M_pad // tm
        grid_n = I_pad // tn

        # ---------------- operand padding (lane-dense, cheap) ----------------
        xp, wp, bp = x2d, w, b2d
        if M_pad != M:
            xp = jnp.pad(xp, ((0, M_pad - M), (0, 0)))
        if I_pad != I:
            wp = jnp.pad(wp, ((0, 0), (0, I_pad - I)))
            bp = jnp.pad(bp, ((0, 0), (0, I_pad - I)))

        # ---------------- specs ----------------------------------------------
        if resident:
            grid = (grid_m,)
            w_kwargs = {}
            if single_buffer_w:
                # Constant block index => one fetch; one buffer is enough.
                w_kwargs = dict(pipeline_mode=pl.Buffered(1))
            in_specs = [
                pl.BlockSpec((tm, H), lambda i: (i, 0)),
                pl.BlockSpec((H, I_pad), lambda i: (0, 0), **w_kwargs),
                pl.BlockSpec((1, I_pad), lambda i: (0, 0)),
            ]
            out_specs = pl.BlockSpec((tm, I_pad), lambda i: (i, 0))
            dims = ("parallel",)
        else:
            # Streaming-W fallback: j (W columns) outer, i (rows) inner so the
            # big W tile is revisit-cached; only the small X block re-streams.
            grid = (grid_n, grid_m)
            in_specs = [
                pl.BlockSpec((tm, H), lambda j, i: (i, 0)),
                pl.BlockSpec((H, tn), lambda j, i: (0, j)),
                pl.BlockSpec((1, tn), lambda j, i: (0, j)),
            ]
            out_specs = pl.BlockSpec((tm, tn), lambda j, i: (i, j))
            dims = ("parallel", "parallel")

        est = (2 * tm * H * x_itemsize + tm * H * w_itemsize + w_vmem
               + bias_vmem + 2 * tm * tn * out_itemsize + 3 * tm * tn * 4)
        vmem_limit = int(min(cap, max(32 << 20, est + (2 << 20))))

        cost = pl.CostEstimate(
            flops=2 * M_pad * H * I_pad,
            transcendentals=M_pad * I_pad,
            bytes_accessed=(M_pad * H * x_itemsize + H * I_pad * w_itemsize
                            + I_pad * 4 + M_pad * I_pad * out_itemsize),
        )

        return pl.pallas_call(
            kernel,
            out_shape=jax.ShapeDtypeStruct((M_pad, I_pad), out_dtype),
            grid_spec=pltpu.PrefetchScalarGridSpec(
                num_scalar_prefetch=0,
                grid=grid,
                in_specs=in_specs,
                out_specs=out_specs,
            ),
            compiler_params=pltpu.CompilerParams(
                dimension_semantics=dims,
                vmem_limit_bytes=vmem_limit),
            cost_estimate=cost,
        )(xp, wp, bp)

    try:
        out2d = run(single_buffer_w=True)
    except Exception:
        # pl.Buffered(1) unsupported on this build -> re-tile with a default
        # double-buffered resident/streamed W and retry.
        out2d = run(single_buffer_w=False)

    return out2d[:M, :I].reshape(B, S, I)


if __name__ == "__main__":
    # Small BERT-like config: hidden_size=128, intermediate_size=512
    batch, seq, hidden, intermediate = 2, 8, 128, 512

    key = jax.random.PRNGKey(0)
    kx, kw, kb = jax.random.split(key, 3)

    x = jax.random.normal(kx, (batch, seq, hidden), dtype=jnp.float32)
    # PyTorch Linear weight is [intermediate, hidden]; we keep its transpose.
    w = (jax.random.normal(kw, (hidden, intermediate), dtype=jnp.float32)
         * (1.0 / math.sqrt(hidden)))
    b = jax.random.normal(kb, (intermediate,), dtype=jnp.float32) * 0.02

    out = bert_intermediate(x, w, b)
    out = jax.block_until_ready(out)

    # Reference (exact erf GELU) in f32; tolerance loosened for the bf16
    # MXU operands (accumulation is f32, so error is input rounding only).
    ref = jax.nn.gelu(x @ w + b, approximate=False)
    assert out.shape == (batch, seq, intermediate)
    max_err = float(jnp.max(jnp.abs(out.astype(jnp.float32) - ref)))
    assert jnp.allclose(out.astype(jnp.float32), ref, atol=3e-2, rtol=3e-2), (
        f"max abs err {max_err}")

    print("KERNEL_OK")
</pallas_src>

<mosaic_0001>
module attributes {stable_mosaic.version = 11 : i64} {
  func.func @_bert_intermediate_kernel(%arg0: i32, %arg1: memref<8x128xf32, #tpu.memory_space<vmem>>, %arg2: memref<128x512xbf16, #tpu.memory_space<vmem>>, %arg3: memref<1x512xf32, #tpu.memory_space<vmem>>, %arg4: memref<8x512xf32, #tpu.memory_space<vmem>>) attributes {dimension_semantics = [#tpu.dimension_semantics<parallel>], iteration_bounds = array<i64: 2>, scalar_prefetch = 0 : i64, scratch_operands = 0 : i64, tpu.core_type = #tpu.core_type<tc>, window_params = [{transform_indices = @transform_0, window_bounds = array<i64: 8, 128>}, {pipeline_mode = #tpu.pipeline_mode<synchronous>, transform_indices = @transform_1, window_bounds = array<i64: 128, 512>}, {pipeline_mode = #tpu.pipeline_mode<synchronous>, transform_indices = @transform_2, window_bounds = array<i64: 1, 512>}, {transform_indices = @transform_3, window_bounds = array<i64: 8, 512>}]} {
    %c0 = arith.constant 0 : index
    %c0_0 = arith.constant 0 : index
    %0 = vector.load %arg1[%c0, %c0_0] : memref<8x128xf32, #tpu.memory_space<vmem>>, vector<8x128xf32>
    %1 = arith.truncf %0 : vector<8x128xf32> to vector<8x128xbf16>
    %c0_1 = arith.constant 0 : index
    %c0_2 = arith.constant 0 : index
    %2 = vector.load %arg2[%c0_1, %c0_2] : memref<128x512xbf16, #tpu.memory_space<vmem>>, vector<128x512xbf16>
    %cst = arith.constant dense<0.000000e+00> : vector<8x512xf32>
    %3 = tpu.matmul %1, %2, %cst {dimension_numbers = #tpu.dot_dimension_numbers<[1], [0], [0], [1], [0, 0, 1, 1], [], []>} : vector<8x128xbf16>, vector<128x512xbf16>, vector<8x512xf32> -> vector<8x512xf32>
    %c0_3 = arith.constant 0 : index
    %c0_4 = arith.constant 0 : index
    %4 = vector.load %arg3[%c0_3, %c0_4] : memref<1x512xf32, #tpu.memory_space<vmem>>, vector<1x512xf32>
    %5 = vector.broadcast %4 : vector<1x512xf32> to vector<8x512xf32>
    %6 = arith.addf %3, %5 : vector<8x512xf32>
    %cst_5 = arith.constant 5.000000e-01 : f32
    %7 = vector.broadcast %cst_5 : f32 to vector<8x512xf32>
    %8 = arith.mulf %7, %6 : vector<8x512xf32>
    %cst_6 = arith.constant 0.707106769 : f32
    %9 = vector.broadcast %cst_6 : f32 to vector<8x512xf32>
    %10 = arith.mulf %6, %9 : vector<8x512xf32>
    %11 = math.erf %10 : vector<8x512xf32>
    %cst_7 = arith.constant 1.000000e+00 : f32
    %12 = vector.broadcast %cst_7 : f32 to vector<8x512xf32>
    %13 = arith.addf %12, %11 : vector<8x512xf32>
    %14 = arith.mulf %8, %13 : vector<8x512xf32>
    %c0_8 = arith.constant 0 : index
    %c0_9 = arith.constant 0 : index
    %15 = vector.load %arg4[%c0_8, %c0_9] : memref<8x512xf32, #tpu.memory_space<vmem>>, vector<8x512xf32>
    tpu.vector_store %arg4[%c0_8, %c0_9], %14 {strides = array<i32>} : memref<8x512xf32, #tpu.memory_space<vmem>>, vector<8x512xf32>,
    return
  }
  func.func @transform_0(%arg0: i32) -> (i32, i32) {
    %c0_i32 = arith.constant 0 : i32
    %c0_i32_0 = arith.constant 0 : i32
    return %arg0, %c0_i32 : i32, i32
  }
  func.func @transform_1(%arg0: i32) -> (i32, i32) {
    %c0_i32 = arith.constant 0 : i32
    %c0_i32_0 = arith.constant 0 : i32
    %c0_i32_1 = arith.constant 0 : i32
    return %c0_i32, %c0_i32_0 : i32, i32
  }
  func.func @transform_2(%arg0: i32) -> (i32, i32) {
    %c0_i32 = arith.constant 0 : i32
    %c0_i32_0 = arith.constant 0 : i32
    %c0_i32_1 = arith.constant 0 : i32
    return %c0_i32, %c0_i32_0 : i32, i32
  }
  func.func @transform_3(%arg0: i32) -> (i32, i32) {
    %c0_i32 = arith.constant 0 : i32
    %c0_i32_0 = arith.constant 0 : i32
    return %arg0, %c0_i32 : i32, i32
  }
}

module attributes {stable_mosaic.version = 11 : i64} {
  func.func @_bert_intermediate_kernel(%arg0: i32, %arg1: memref<8x128xf32, #tpu.memory_space<vmem>>, %arg2: memref<128x512xbf16, #tpu.memory_space<vmem>>, %arg3: memref<1x512xf32, #tpu.memory_space<vmem>>, %arg4: memref<8x512xf32, #tpu.memory_space<vmem>>) attributes {dimension_semantics = [#tpu.dimension_semantics<parallel>], iteration_bounds = array<i64: 2>, scalar_prefetch = 0 : i64, scratch_operands = 0 : i64, tpu.core_type = #tpu.core_type<tc>, window_params = [{transform_indices = @transform_0, window_bounds = array<i64: 8, 128>}, {pipeline_mode = #tpu.pipeline_mode<synchronous>, transform_indices = @transform_1, window_bounds = array<i64: 128, 512>}, {pipeline_mode = #tpu.pipeline_mode<synchronous>, transform_indices = @transform_2, window_bounds = array<i64: 1, 512>}, {transform_indices = @transform_3, window_bounds = array<i64: 8, 512>}]} {
    %c0 = arith.constant 0 : index
    %c0_0 = arith.constant 0 : index
    %0 = vector.load %arg1[%c0, %c0_0] : memref<8x128xf32, #tpu.memory_space<vmem>>, vector<8x128xf32>
    %1 = arith.truncf %0 : vector<8x128xf32> to vector<8x128xbf16>
    %c0_1 = arith.constant 0 : index
    %c0_2 = arith.constant 0 : index
    %2 = vector.load %arg2[%c0_1, %c0_2] : memref<128x512xbf16, #tpu.memory_space<vmem>>, vector<128x512xbf16>
    %cst = arith.constant dense<0.000000e+00> : vector<8x512xf32>
    %3 = tpu.matmul %1, %2, %cst {dimension_numbers = #tpu.dot_dimension_numbers<[1], [0], [0], [1], [0, 0, 1, 1], [], []>} : vector<8x128xbf16>, vector<128x512xbf16>, vector<8x512xf32> -> vector<8x512xf32>
    %c0_3 = arith.constant 0 : index
    %c0_4 = arith.constant 0 : index
    %4 = vector.load %arg3[%c0_3, %c0_4] : memref<1x512xf32, #tpu.memory_space<vmem>>, vector<1x512xf32>
    %5 = vector.broadcast %4 : vector<1x512xf32> to vector<8x512xf32>
    %6 = arith.addf %3, %5 : vector<8x512xf32>
    %cst_5 = arith.constant 5.000000e-01 : f32
    %7 = vector.broadcast %cst_5 : f32 to vector<8x512xf32>
    %8 = arith.mulf %7, %6 : vector<8x512xf32>
    %cst_6 = arith.constant 0.707106769 : f32
    %9 = vector.broadcast %cst_6 : f32 to vector<8x512xf32>
    %10 = arith.mulf %6, %9 : vector<8x512xf32>
    %11 = math.erf %10 : vector<8x512xf32>
    %cst_7 = arith.constant 1.000000e+00 : f32
    %12 = vector.broadcast %cst_7 : f32 to vector<8x512xf32>
    %13 = arith.addf %12, %11 : vector<8x512xf32>
    %14 = arith.mulf %8, %13 : vector<8x512xf32>
    %c0_8 = arith.constant 0 : index
    %c0_9 = arith.constant 0 : index
    %15 = vector.load %arg4[%c0_8, %c0_9] : memref<8x512xf32, #tpu.memory_space<vmem>>, vector<8x512xf32>
    tpu.vector_store %arg4[%c0_8, %c0_9], %14 {strides = array<i32>} : memref<8x512xf32, #tpu.memory_space<vmem>>, vector<8x512xf32>,
    return
  }
  func.func @transform_0(%arg0: i32) -> (i32, i32) {
    %c0_i32 = arith.constant 0 : i32
    %c0_i32_0 = arith.constant 0 : i32
    return %arg0, %c0_i32 : i32, i32
  }
  func.func @transform_1(%arg0: i32) -> (i32, i32) {
    %c0_i32 = arith.constant 0 : i32
    %c0_i32_0 = arith.constant 0 : i32
    %c0_i32_1 = arith.constant 0 : i32
    return %c0_i32, %c0_i32_0 : i32, i32
  }
  func.func @transform_2(%arg0: i32) -> (i32, i32) {
    %c0_i32 = arith.constant 0 : i32
    %c0_i32_0 = arith.constant 0 : i32
    %c0_i32_1 = arith.constant 0 : i32
    return %c0_i32, %c0_i32_0 : i32, i32
  }
  func.func @transform_3(%arg0: i32) -> (i32, i32) {
    %c0_i32 = arith.constant 0 : i32
    %c0_i32_0 = arith.constant 0 : i32
    return %arg0, %c0_i32 : i32, i32
  }
}

</mosaic_0001>

<llo_original>
// kernel: tpu_custom_call.1
$region0: #{tpu_custom_call.1}
  #allocation0 [shape = 'u32[]', space=smem, size = 0x4, offset = 0x4, fixed_abs, tag = 'smem constant byte address 0x4 - core index']
  #allocation1 [shape = 'u32[144,128]{1,0:T(1,128)}', space=vmem, size = 0x12000, scoped, tag = 'internal scratch']
  %s0 = inlined_call_operand.hbm [shape: f32[16,128], index: 0, kind: input, shape index: {}]
  %s1 = inlined_call_operand.hbm [shape: bf16[128,512], index: 1, kind: input, shape index: {}]
  %s2 = inlined_call_operand.vmem [shape: f32[1,512], index: 2, kind: input, shape index: {}]
  %s3 = inlined_call_operand.hbm [shape: f32[16,512], index: 3, kind: output, shape index: {}]
  %s4 = sld [smem:[#allocation0]]
  $region53: #{tpu_custom_call.1} parent=0
    _
  %s6 = ssub.s32 1, %s4
  %s7 = scalar_select 0, %s6, %s4
  $region1: #{tpu_custom_call.1} parent=0
    #allocation2 [shape = 'u8[8192]{0}', space=vmem, size = 0x2000, scoped, tag = 'input window, operand 0']
    #allocation3 [shape = 's32[2]{0}', space=sflag, size = 0x8, scoped, tag = 'scoped memory for tpu_custom_call.1']
    #allocation4 [shape = 's32[2]{0}', space=sflag, size = 0x8, scoped, tag = 'scoped memory for tpu_custom_call.1']
    #allocation5 [shape = 'u8[131072]{0}', space=vmem, size = 0x20000, scoped, tag = 'input window, operand 1, single buffered']
    #allocation6 [shape = 's32[1]{0}', space=sflag, size = 0x4, scoped, tag = 'scoped memory for tpu_custom_call.1']
    #allocation7 [shape = 'u8[32768]{0}', space=vmem, size = 0x8000, scoped, tag = 'output window, operand 0']
    %8 = vsyncpa [#allocation3], 0
    %s9 = scalar_lea.sflag [#allocation3], 1
    %10 = vsyncpa %s9, 0
    %11 = vsyncpa [#allocation6], 0
    %12 = vsyncpa [#allocation4], 0
    %s13 = scalar_lea.sflag [#allocation4], 1
    %14 = vsyncpa %s13, 0
    loop: start=0, step=1, limit=4
    $region2: #{tpu_custom_call.1} parent=1 // loop_pre_header
      _
    $region3: #{tpu_custom_call.1} parent=1 // loop_header
      %s16 = sphi 0, %s20
      %p17 = scmp.ge.s32.totalorder %s16, 4
      %s26 = sphi 0, %s28
      %s29 = sphi 0, %s26
      %s30 = sphi 0, %s29
      %s46 = sphi 0, %s30
      %s50 = sphi 0, %s50
      %s52 = sphi 0, %s50
      %s53 = sphi 0, %s52
      %s67 = sphi 0, %s53
      %s71 = sphi 0, %s71
      %s73 = sphi 0, %s71
      %s74 = sphi 0, %s73
      %s88 = sphi 0, %s74
      %s94 = sphi 0, %s96
      %s97 = sphi 0, %s94
      %s98 = sphi 0, %s97
      %s114 = sphi 0, %s98
    $region4: #{tpu_custom_call.1} parent=1 // loop_header_branch
      %19 = sbr.rel (%p17) target = $region8
    $region5: #{tpu_custom_call.1} parent=1 // loop_body
      %s21 = ssub.s32 %s16, 1
      %s22 = ssub.s32 %s16, 2
      %s23 = sadd.s32 %s16, 1
      %s24 = ssub.s32 %s16, %s23
      %p25 = scmp.eq.s32.totalorder %s24, 0
      %s27 = sadd.s32 %s26, 1
      %s28 = scalar_select %p25, %s26, %s27
      %p31 = pneg %p25
      %p32 = scmp.eq.s32.totalorder %s16, 1
      %p33 = por %p31, %p32
      %p34 = scmp.ne.s32.totalorder %s26, %s29
      %p35 = scmp.eq.s32.totalorder %s16, 0
      %p36 = por %p34, %p35
      %p37 = scmp.ne.s32.totalorder %s26, %s29
      %p38 = scmp.eq.s32.totalorder %s21, 1
      %p39 = por %p37, %p38
      %p40 = scmp.ne.s32.totalorder %s29, %s30
      %p41 = scmp.eq.s32.totalorder %s21, 0
      %p42 = por %p40, %p41
      %p43 = scmp.ne.s32.totalorder %s29, %s30
      %p44 = scmp.eq.s32.totalorder %s22, 1
      %p45 = por %p43, %p44
      %p47 = scmp.ne.s32.totalorder %s30, %s46
      %p48 = scmp.eq.s32.totalorder %s22, 0
      %p49 = por %p47, %p48
      %s51 = sadd.s32 %s50, 1
      %p54 = scmp.eq.s32.totalorder %s16, 1
      %p55 = scmp.ne.s32.totalorder %s50, %s52
      %p56 = scmp.eq.s32.totalorder %s16, 0
      %p57 = por %p55, %p56
      %p58 = scmp.ne.s32.totalorder %s50, %s52
      %p59 = scmp.eq.s32.totalorder %s21, 1
      %p60 = por %p58, %p59
      %p61 = scmp.ne.s32.totalorder %s52, %s53
      %p62 = scmp.eq.s32.totalorder %s21, 0
      %p63 = por %p61, %p62
      %p64 = scmp.ne.s32.totalorder %s52, %s53
      %p65 = scmp.eq.s32.totalorder %s22, 1
      %p66 = por %p64, %p65
      %p68 = scmp.ne.s32.totalorder %s53, %s67
      %p69 = scmp.eq.s32.totalorder %s22, 0
      %p70 = por %p68, %p69
      %s72 = sadd.s32 %s71, 1
      %p75 = scmp.eq.s32.totalorder %s16, 1
      %p76 = scmp.ne.s32.totalorder %s71, %s73
      %p77 = scmp.eq.s32.totalorder %s16, 0
      %p78 = por %p76, %p77
      %p79 = scmp.ne.s32.totalorder %s71, %s73
      %p80 = scmp.eq.s32.totalorder %s21, 1
      %p81 = por %p79, %p80
      %p82 = scmp.ne.s32.totalorder %s73, %s74
      %p83 = scmp.eq.s32.totalorder %s21, 0
      %p84 = por %p82, %p83
      %p85 = scmp.ne.s32.totalorder %s73, %s74
      %p86 = scmp.eq.s32.totalorder %s22, 1
      %p87 = por %p85, %p86
      %p89 = scmp.ne.s32.totalorder %s74, %s88
      %p90 = scmp.eq.s32.totalorder %s22, 0
      %p91 = por %p89, %p90
      %s92 = ssub.s32 %s16, %s23
      %p93 = scmp.eq.s32.totalorder %s92, 0
      %s95 = sadd.s32 %s94, 1
      %s96 = scalar_select %p93, %s94, %s95
      %p99 = pneg %p93
      %p100 = scmp.eq.s32.totalorder %s16, 1
      %p101 = por %p99, %p100
      %p102 = scmp.ne.s32.totalorder %s94, %s97
      %p103 = scmp.eq.s32.totalorder %s16, 0
      %p104 = por %p102, %p103
      %p105 = scmp.ne.s32.totalorder %s94, %s97
      %p106 = scmp.eq.s32.totalorder %s21, 1
      %p107 = por %p105, %p106
      %p108 = scmp.ne.s32.totalorder %s97, %s98
      %p109 = scmp.eq.s32.totalorder %s21, 0
      %p110 = por %p108, %p109
      %p111 = scmp.ne.s32.totalorder %s97, %s98
      %p112 = scmp.eq.s32.totalorder %s22, 1
      %p113 = por %p111, %p112
      %p115 = scmp.ne.s32.totalorder %s98, %s114
      %p116 = scmp.eq.s32.totalorder %s22, 0
      %p117 = por %p115, %p116
      %p118 = scmp.le.s32.totalorder 1, %s16
      %p119 = scmp.lt.s32.totalorder %s16, 3
      %p120 = pnand %p118, %p119
      %p121 = pneg %p120
      // Predicated region
      $region9: #{tpu_custom_call.1} parent=5 // pred_check
        _
      $region10: #{tpu_custom_call.1} parent=5 // pred_check_branch
        %123 = sbr.rel (%p120) target = $region12
      $region11: #{tpu_custom_call.1} parent=5 // pred_region
        %s124 = ssub.s32 %s16, 1
        // Predicated region
        $region13: #{tpu_custom_call.1} parent=11 // pred_check
          %p125 = pneg %p63
        $region14: #{tpu_custom_call.1} parent=11 // pred_check_branch
          %127 = sbr.rel (%p125) target = $region16
        $region15: #{tpu_custom_call.1} parent=11 // pred_region
          %s129 = ssub.s32 4096, 4096
          %130 = vsyncadd [#allocation6], %s129
          %s131 = sshll.u32 [#allocation5], 4
          %s132 = int_to_ptr.vmem [resolvable:$true] %s131
          %137 = dma.hbm_to_vmem [thread:$0]  %s1, 4096, %s132, [#allocation6], 256, 256, 16
        $region16: #{tpu_custom_call.1} parent=11 // pred_fallthru
          _
        // Predicated region
        $region17: #{tpu_custom_call.1} parent=11 // pred_check
          %p138 = pneg %p84
        $region18: #{tpu_custom_call.1} parent=11 // pred_check_branch
          %140 = sbr.rel (%p138) target = $region20
        $region19: #{tpu_custom_call.1} parent=11 // pred_region
          _
        $region20: #{tpu_custom_call.1} parent=11 // pred_fallthru
          _
      $region12: #{tpu_custom_call.1} parent=5 // pred_fallthru
        _
      %p141 = scmp.lt.s32.totalorder %s16, 2
      // Predicated region
      $region21: #{tpu_custom_call.1} parent=5 // pred_check
        %p142 = pneg %p141
      $region22: #{tpu_custom_call.1} parent=5 // pred_check_branch
        %144 = sbr.rel (%p142) target = $region24
      $region23: #{tpu_custom_call.1} parent=5 // pred_region
        // Predicated region
        $region25: #{tpu_custom_call.1} parent=23 // pred_check
          %p145 = pneg %p36
        $region26: #{tpu_custom_call.1} parent=23 // pred_check_branch
          %147 = sbr.rel (%p145) target = $region28
        $region27: #{tpu_custom_call.1} parent=23 // pred_region
          %s148 = sand.u32 %s26, 1
          %s149 = scalar_lea.sflag [#allocation3], %s148
          %s150 = sand.u32 %s26, 1
          %s151 = smul.addr %s150, 8
          %s152 = scalar_lea.vmem [#allocation2], %s151
          %s154 = ssub.s32 128, 128
          %155 = vsyncadd %s149, %s154
          %s156 = smul.addr %s16, 128
          %s157 = scalar_lea.hbm %s0, %s156
          %s159 = sshll.u32 %s152, 4
          %s160 = int_to_ptr.vmem [resolvable:$true] %s159
          %162 = dma.hbm_to_vmem [thread:$0]  %s157, 128, %s160, %s149
        $region28: #{tpu_custom_call.1} parent=23 // pred_fallthru
          _
      $region24: #{tpu_custom_call.1} parent=5 // pred_fallthru
        _
      %p163 = scmp.le.s32.totalorder 1, %s16
      %p164 = scmp.lt.s32.totalorder %s16, 3
      %p165 = pnand %p163, %p164
      %p166 = pneg %p165
      // Predicated region
      $region29: #{tpu_custom_call.1} parent=5 // pred_check
        _
      $region30: #{tpu_custom_call.1} parent=5 // pred_check_branch
        %168 = sbr.rel (%p165) target = $region32
      $region31: #{tpu_custom_call.1} parent=5 // pred_region
        %s169 = ssub.s32 %s16, 1
        %s170 = sand.u32 %s29, 1
        %s171 = scalar_lea.sflag [#allocation3], %s170
        %s172 = sand.u32 %s29, 1
        %s173 = smul.addr %s172, 8
        %s174 = scalar_lea.vmem [#allocation2], %s173
        // Predicated region
        $region33: #{tpu_custom_call.1} parent=31 // pred_check
          %p175 = pneg %p42
        $region34: #{tpu_custom_call.1} parent=31 // pred_check_branch
          %177 = sbr.rel (%p175) target = $region36
        $region35: #{tpu_custom_call.1} parent=31 // pred_region
          %178 = dma.done %s171, 128
        $region36: #{tpu_custom_call.1} parent=31 // pred_fallthru
          _
        // Predicated region
        $region37: #{tpu_custom_call.1} parent=31 // pred_check
          %p179 = pneg %p63
        $region38: #{tpu_custom_call.1} parent=31 // pred_check_branch
          %181 = sbr.rel (%p179) target = $region40
        $region39: #{tpu_custom_call.1} parent=31 // pred_region
          %182 = dma.done [#allocation6], 4096
        $region40: #{tpu_custom_call.1} parent=31 // pred_fallthru
          _
        %s183 = sand.u32 %s29, 1
        %s184 = scalar_lea.sflag [#allocation3], %s183
        %s185 = sand.u32 %s29, 1
        %s186 = smul.addr %s185, 8
        %s187 = scalar_lea.vmem [#allocation2], %s186
        %p188 = pneg %p42
        %p189 = pneg %p39
        %p190 = pneg %p63
        %p191 = pneg %p60
        %p192 = pneg %p84
        %p193 = pneg %p81
        %p194 = pneg %p110
        %p195 = pneg %p107
        %s196 = sand.u32 %s97, 1
        %s197 = scalar_lea.sflag [#allocation4], %s196
        %s198 = sand.u32 %s97, 1
        %s199 = smul.addr %s198, 32
        %s200 = scalar_lea.vmem [#allocation7], %s199
        %v202 = vld [vmem:[%s174] sm:$0xff]
        %v203 = vpack.c.bf16 %v202, %v202
        %v204 = vld [vmem:[#allocation5] sm:$0xff]
        %v205 = vld [vmem:[#allocation5 + $0x8] sm:$0xff]
        %v206 = vld [vmem:[#allocation5 + $0x10] sm:$0xff]
        %v207 = vld [vmem:[#allocation5 + $0x18] sm:$0xff]
        %v208 = vld [vmem:[#allocation5 + $0x20] sm:$0xff]
        %v209 = vld [vmem:[#allocation5 + $0x28] sm:$0xff]
        %v210 = vld [vmem:[#allocation5 + $0x30] sm:$0xff]
        %v211 = vld [vmem:[#allocation5 + $0x38] sm:$0xff]
        %v212 = vld [vmem:[#allocation5 + $0x40] sm:$0xff]
        %v213 = vld [vmem:[#allocation5 + $0x48] sm:$0xff]
        %v214 = vld [vmem:[#allocation5 + $0x50] sm:$0xff]
        %v215 = vld [vmem:[#allocation5 + $0x58] sm:$0xff]
        %v216 = vld [vmem:[#allocation5 + $0x60] sm:$0xff]
        %v217 = vld [vmem:[#allocation5 + $0x68] sm:$0xff]
        %v218 = vld [vmem:[#allocation5 + $0x70] sm:$0xff]
        %v219 = vld [vmem:[#allocation5 + $0x78] sm:$0xff]
        %v220 = vld [vmem:[#allocation5 + $0x80] sm:$0xff]
        %v221 = vld [vmem:[#allocation5 + $0x88] sm:$0xff]
        %v222 = vld [vmem:[#allocation5 + $0x90] sm:$0xff]
        %v223 = vld [vmem:[#allocation5 + $0x98] sm:$0xff]
        %v224 = vld [vmem:[#allocation5 + $0xa0] sm:$0xff]
        %v225 = vld [vmem:[#allocation5 + $0xa8] sm:$0xff]
        %v226 = vld [vmem:[#allocation5 + $0xb0] sm:$0xff]
        %v227 = vld [vmem:[#allocation5 + $0xb8] sm:$0xff]
        %v228 = vld [vmem:[#allocation5 + $0xc0] sm:$0xff]
        %v229 = vld [vmem:[#allocation5 + $0xc8] sm:$0xff]
        %v230 = vld [vmem:[#allocation5 + $0xd0] sm:$0xff]
        %v231 = vld [vmem:[#allocation5 + $0xd8] sm:$0xff]
        %v232 = vld [vmem:[#allocation5 + $0xe0] sm:$0xff]
        %v233 = vld [vmem:[#allocation5 + $0xe8] sm:$0xff]
        %v234 = vld [vmem:[#allocation5 + $0xf0] sm:$0xff]
        %v235 = vld [vmem:[#allocation5 + $0xf8] sm:$0xff]
        %v236 = vld [vmem:[%s2] sm:$0xf]
        %v238 = vlaneseq
        %v239 = vshrl.u32 %v238, 7
        %v240 = vsub.s32 0, %v239
        %v241 = vrot.slane %v236, %v240
        %v242 = vlaneseq
        %v243 = vshrl.u32 %v242, 7
        %v244 = vsub.s32 1, %v243
        %v245 = vrot.slane %v236, %v244
        %v246 = vlaneseq
        %v247 = vshrl.u32 %v246, 7
        %v248 = vsub.s32 2, %v247
        %v249 = vrot.slane %v236, %v248
        %v250 = vlaneseq
        %v251 = vshrl.u32 %v250, 7
        %v252 = vsub.s32 3, %v251
        %v253 = vrot.slane %v236, %v252
        %v290 = vunpack.c.l.b16 %v204
        %v291 = vunpack.c.h.b16 %v204
        %v292 = vunpack.c.l.b16 %v205
        %v293 = vunpack.c.h.b16 %v205
        %v294 = vunpack.c.l.b16 %v206
        %v295 = vunpack.c.h.b16 %v206
        %v296 = vunpack.c.l.b16 %v207
        %v297 = vunpack.c.h.b16 %v207
        %v298 = vunpack.c.l.b16 %v208
        %v299 = vunpack.c.h.b16 %v208
        %v300 = vunpack.c.l.b16 %v209
        %v301 = vunpack.c.h.b16 %v209
        %v302 = vunpack.c.l.b16 %v210
        %v303 = vunpack.c.h.b16 %v210
        %v304 = vunpack.c.l.b16 %v211
        %v305 = vunpack.c.h.b16 %v211
        %v306 = vunpack.c.l.b16 %v212
        %v307 = vunpack.c.h.b16 %v212
        %v308 = vunpack.c.l.b16 %v213
        %v309 = vunpack.c.h.b16 %v213
        %v310 = vunpack.c.l.b16 %v214
        %v311 = vunpack.c.h.b16 %v214
        %v312 = vunpack.c.l.b16 %v215
        %v313 = vunpack.c.h.b16 %v215
        %v314 = vunpack.c.l.b16 %v216
        %v315 = vunpack.c.h.b16 %v216
        %v316 = vunpack.c.l.b16 %v217
        %v317 = vunpack.c.h.b16 %v217
        %v318 = vunpack.c.l.b16 %v218
        %v319 = vunpack.c.h.b16 %v218
        %v320 = vunpack.c.l.b16 %v219
        %v321 = vunpack.c.h.b16 %v219
        %v322 = vunpack.c.l.b16 %v220
        %v323 = vunpack.c.h.b16 %v220
        %v324 = vunpack.c.l.b16 %v221
        %v325 = vunpack.c.h.b16 %v221
        %v326 = vunpack.c.l.b16 %v222
        %v327 = vunpack.c.h.b16 %v222
        %v328 = vunpack.c.l.b16 %v223
        %v329 = vunpack.c.h.b16 %v223
        %v330 = vunpack.c.l.b16 %v224
        %v331 = vunpack.c.h.b16 %v224
        %v332 = vunpack.c.l.b16 %v225
        %v333 = vunpack.c.h.b16 %v225
        %v334 = vunpack.c.l.b16 %v226
        %v335 = vunpack.c.h.b16 %v226
        %v336 = vunpack.c.l.b16 %v227
        %v337 = vunpack.c.h.b16 %v227
        %v338 = vunpack.c.l.b16 %v228
        %v339 = vunpack.c.h.b16 %v228
        %v340 = vunpack.c.l.b16 %v229
        %v341 = vunpack.c.h.b16 %v229
        %v342 = vunpack.c.l.b16 %v230
        %v343 = vunpack.c.h.b16 %v230
        %v344 = vunpack.c.l.b16 %v231
        %v345 = vunpack.c.h.b16 %v231
        %v346 = vunpack.c.l.b16 %v232
        %v347 = vunpack.c.h.b16 %v232
        %v348 = vunpack.c.l.b16 %v233
        %v349 = vunpack.c.h.b16 %v233
        %v350 = vunpack.c.l.b16 %v234
        %v351 = vunpack.c.h.b16 %v234
        %v352 = vunpack.c.l.b16 %v235
        %v353 = vunpack.c.h.b16 %v235
        %v354 = vpack.c.b16 %v294, %v290
        %v355 = vpack.c.b16 %v295, %v291
        %v356 = vpack.c.b16 %v296, %v292
        %v357 = vpack.c.b16 %v297, %v293
        %v358 = vpack.c.b16 %v302, %v298
        %v359 = vpack.c.b16 %v303, %v299
        %v360 = vpack.c.b16 %v304, %v300
        %v361 = vpack.c.b16 %v305, %v301
        %v362 = vpack.c.b16 %v310, %v306
        %v363 = vpack.c.b16 %v311, %v307
        %v364 = vpack.c.b16 %v312, %v308
        %v365 = vpack.c.b16 %v313, %v309
        %v366 = vpack.c.b16 %v318, %v314
        %v367 = vpack.c.b16 %v319, %v315
        %v368 = vpack.c.b16 %v320, %v316
        %v369 = vpack.c.b16 %v321, %v317
        %v370 = vpack.c.b16 %v326, %v322
        %v371 = vpack.c.b16 %v327, %v323
        %v372 = vpack.c.b16 %v328, %v324
        %v373 = vpack.c.b16 %v329, %v325
        %v374 = vpack.c.b16 %v334, %v330
        %v375 = vpack.c.b16 %v335, %v331
        %v376 = vpack.c.b16 %v336, %v332
        %v377 = vpack.c.b16 %v337, %v333
        %v378 = vpack.c.b16 %v342, %v338
        %v379 = vpack.c.b16 %v343, %v339
        %v380 = vpack.c.b16 %v344, %v340
        %v381 = vpack.c.b16 %v345, %v341
        %v382 = vpack.c.b16 %v350, %v346
        %v383 = vpack.c.b16 %v351, %v347
        %v384 = vpack.c.b16 %v352, %v348
        %v385 = vpack.c.b16 %v353, %v349
        %418 = vmatprep.subr.bf16.mxu0 %v355
        %419 = vmatpush1.bf16.msra.mxu0 %v354
        %420 = vmatprep.subr.bf16.mxu0 %v359
        %421 = vmatpush1.bf16.msra.mxu0 %v358
        %422 = vmatprep.subr.bf16.mxu0 %v363
        %423 = vmatpush1.bf16.msra.mxu0 %v362
        %424 = vmatprep.subr.bf16.mxu0 %v367
        %425 = vmatpush1.bf16.msra.mxu0 %v366
        %426 = vmatprep.subr.bf16.mxu0 %v371
        %427 = vmatpush1.bf16.msra.mxu0 %v370
        %428 = vmatprep.subr.bf16.mxu0 %v375
        %429 = vmatpush1.bf16.msra.mxu0 %v374
        %430 = vmatprep.subr.bf16.mxu0 %v379
        %431 = vmatpush1.bf16.msra.mxu0 %v378
        %432 = vmatprep.subr.bf16.mxu0 %v383
        %433 = vmatpush1.bf16.msra.mxu0 %v382
        %434 = vmatprep.subr.bf16.mxu0 0
        %435 = vmatpush1.bf16.msra.mxu0 0
        %436 = vmatprep.subr.bf16.mxu0 0
        %437 = vmatpush1.bf16.msra.mxu0 0
        %438 = vmatprep.subr.bf16.mxu0 0
        %439 = vmatpush1.bf16.msra.mxu0 0
        %440 = vmatprep.subr.bf16.mxu0 0
        %441 = vmatpush1.bf16.msra.mxu0 0
        %442 = vmatprep.subr.bf16.mxu0 0
        %443 = vmatpush1.bf16.msra.mxu0 0
        %444 = vmatprep.subr.bf16.mxu0 0
        %445 = vmatpush1.bf16.msra.mxu0 0
        %446 = vmatprep.subr.bf16.mxu0 0
        %447 = vmatpush1.bf16.msra.mxu0 0
        %448 = vmatprep.subr.bf16.mxu0 0
        %449 = vmatpush1.bf16.msra.mxu0 0
        %450 = vmatprep.mubr.bf16.mxu0 0
        %451 = vmatmul.mubr.bf16.gmra.mrb[0].mxu0 %v203
        %v452 = vpop.f32.mrb[0].mxu0
        %v453 = vadd.f32 %v241, %v452
        %v454 = vpop.f32.mrb[0].mxu0
        %v455 = vadd.f32 %v245, %v454
        %v456 = vpop.f32.mrb[0].mxu0
        %v457 = vpop.f32.mrb[0].mxu0
        %458 = vdwg.mxu0
        %459 = vmatprep.subr.bf16.mxu0 %v357
        %460 = vmatpush1.bf16.msra.mxu0 %v356
        %461 = vmatprep.subr.bf16.mxu0 %v361
        %462 = vmatpush1.bf16.msra.mxu0 %v360
        %463 = vmatprep.subr.bf16.mxu0 %v365
        %464 = vmatpush1.bf16.msra.mxu0 %v364
        %465 = vmatprep.subr.bf16.mxu0 %v369
        %466 = vmatpush1.bf16.msra.mxu0 %v368
        %467 = vmatprep.subr.bf16.mxu0 %v373
        %468 = vmatpush1.bf16.msra.mxu0 %v372
        %469 = vmatprep.subr.bf16.mxu0 %v377
        %470 = vmatpush1.bf16.msra.mxu0 %v376
        %471 = vmatprep.subr.bf16.mxu0 %v381
        %472 = vmatpush1.bf16.msra.mxu0 %v380
        %473 = vmatprep.subr.bf16.mxu0 %v385
        %474 = vmatpush1.bf16.msra.mxu0 %v384
        %475 = vmatprep.subr.bf16.mxu0 0
        %476 = vmatpush1.bf16.msra.mxu0 0
        %477 = vmatprep.subr.bf16.mxu0 0
        %478 = vmatpush1.bf16.msra.mxu0 0
        %479 = vmatprep.subr.bf16.mxu0 0
        %480 = vmatpush1.bf16.msra.mxu0 0
        %481 = vmatprep.subr.bf16.mxu0 0
        %482 = vmatpush1.bf16.msra.mxu0 0
        %483 = vmatprep.subr.bf16.mxu0 0
        %484 = vmatpush1.bf16.msra.mxu0 0
        %485 = vmatprep.subr.bf16.mxu0 0
        %486 = vmatpush1.bf16.msra.mxu0 0
        %487 = vmatprep.subr.bf16.mxu0 0
        %488 = vmatpush1.bf16.msra.mxu0 0
        %489 = vmatprep.subr.bf16.mxu0 0
        %490 = vmatpush1.bf16.msra.mxu0 0
        %491 = vmatprep.mubr.bf16.mxu0 0
        %492 = vmatmul.mubr.bf16.gmra.mrb[0].mxu0 %v203
        %v493 = vpop.f32.mrb[0].mxu0
        %v494 = vadd.f32 %v249, %v493
        %v495 = vpop.f32.mrb[0].mxu0
        %v496 = vadd.f32 %v253, %v495
        %v497 = vpop.f32.mrb[0].mxu0
        %v498 = vpop.f32.mrb[0].mxu0
        %499 = vdwg.mxu0
        %v500 = vmul.f32 %v453, 0.5
        %v501 = vmul.f32 %v455, 0.5
        %v502 = vmul.f32 %v494, 0.5
        %v503 = vmul.f32 %v496, 0.5
        %v504 = vmul.f32 %v453, 0.70710677
        %v505 = vmul.f32 %v455, 0.70710677
        %v506 = vmul.f32 %v494, 0.70710677
        %v507 = vmul.f32 %v496, 0.70710677
        %v508 = verf.f32.pop %v504
        %v509 = verf.f32.pop %v505
        %v510 = verf.f32.pop %v506
        %v511 = verf.f32.pop %v507
        %v512 = vadd.f32 %v508, 1.0
        %v513 = vadd.f32 %v509, 1.0
        %v514 = vadd.f32 %v510, 1.0
        %v515 = vadd.f32 %v511, 1.0
        %v516 = vmul.f32 %v500, %v512
        %v517 = vmul.f32 %v501, %v513
        %v518 = vmul.f32 %v502, %v514
        %v519 = vmul.f32 %v503, %v515
        %520 = vst [vmem:[%s200] sm:$0xff] %v516
        %521 = vst [vmem:[%s200 + $0x8] sm:$0xff] %v517
        %522 = vst [vmem:[%s200 + $0x10] sm:$0xff] %v518
        %523 = vst [vmem:[%s200 + $0x18] sm:$0xff] %v519
        %s524 = sand.u32 %s97, 1
        %s525 = scalar_lea.sflag [#allocation4], %s524
        %s526 = sand.u32 %s97, 1
        %s527 = smul.addr %s526, 32
        %s528 = scalar_lea.vmem [#allocation7], %s527
        // Predicated region
        $region41: #{tpu_custom_call.1} parent=31 // pred_check
          %p529 = pneg %p107
        $region42: #{tpu_custom_call.1} parent=31 // pred_check_branch
          %531 = sbr.rel (%p529) target = $region44
        $region43: #{tpu_custom_call.1} parent=31 // pred_region
          %s533 = ssub.s32 512, 512
          %534 = vsyncadd %s525, %s533
          %s535 = smul.addr %s21, 4
          %s536 = smul.addr %s535, 128
          %s537 = scalar_lea.hbm %s3, %s536
          %s539 = sshll.u32 %s528, 4
          %s540 = int_to_ptr.vmem [resolvable:$true] %s539
          %542 = dma.vmem_to_hbm [thread:$0]  %s540, 512, %s537, %s525
        $region44: #{tpu_custom_call.1} parent=31 // pred_fallthru
          _
      $region32: #{tpu_custom_call.1} parent=5 // pred_fallthru
        _
      %p543 = scmp.le.s32.totalorder 2, %s16
      // Predicated region
      $region45: #{tpu_custom_call.1} parent=5 // pred_check
        %p544 = pneg %p543
      $region46: #{tpu_custom_call.1} parent=5 // pred_check_branch
        %546 = sbr.rel (%p544) target = $region48
      $region47: #{tpu_custom_call.1} parent=5 // pred_region
        %s547 = ssub.s32 %s16, 2
        // Predicated region
        $region49: #{tpu_custom_call.1} parent=47 // pred_check
          %p548 = pneg %p113
        $region50: #{tpu_custom_call.1} parent=47 // pred_check_branch
          %550 = sbr.rel (%p548) target = $region52
        $region51: #{tpu_custom_call.1} parent=47 // pred_region
          %s551 = sand.u32 %s98, 1
          %s552 = scalar_lea.sflag [#allocation4], %s551
          %s553 = sand.u32 %s98, 1
          %s554 = smul.addr %s553, 32
          %s555 = scalar_lea.vmem [#allocation7], %s554
          %556 = dma.done %s552, 512
        $region52: #{tpu_custom_call.1} parent=47 // pred_fallthru
          _
      $region48: #{tpu_custom_call.1} parent=5 // pred_fallthru
        _
    $region6: #{tpu_custom_call.1} parent=1 // loop_footer
      %s20 = sadd.s32 1, %s16
    $region7: #{tpu_custom_call.1} parent=1 // loop_footer_branch
      %15 = sbr.rel target = $region3
    $region8: #{tpu_custom_call.1} parent=1 // loop_exit
      _
    %557 = vsyncpa [#allocation3], 1
    %s558 = scalar_lea.sflag [#allocation3], 1
    %559 = vsyncpa %s558, 1
    %560 = vsyncpa [#allocation6], 1
    %561 = vsyncpa [#allocation4], 1
    %s562 = scalar_lea.sflag [#allocation4], 1
    %563 = vsyncpa %s562, 1

// kernel: tpu_custom_call.1
$region0: #{tpu_custom_call.1}
  #allocation0 [shape = 'u32[]', space=smem, size = 0x4, offset = 0x4, fixed_abs, tag = 'smem constant byte address 0x4 - core index']
  #allocation1 [shape = 'u32[144,128]{1,0:T(1,128)}', space=vmem, size = 0x12000, scoped, tag = 'internal scratch']
  %s0 = inlined_call_operand.hbm [shape: f32[16,128], index: 0, kind: input, shape index: {}]
  %s1 = inlined_call_operand.hbm [shape: bf16[128,512], index: 1, kind: input, shape index: {}]
  %s2 = inlined_call_operand.vmem [shape: f32[1,512], index: 2, kind: input, shape index: {}]
  %s3 = inlined_call_operand.hbm [shape: f32[16,512], index: 3, kind: output, shape index: {}]
  %s4 = sld [smem:[#allocation0]]
  $region53: #{tpu_custom_call.1} parent=0
    _
  %s6 = ssub.s32 1, %s4
  %s7 = scalar_select 0, %s6, %s4
  $region1: #{tpu_custom_call.1} parent=0
    #allocation2 [shape = 'u8[8192]{0}', space=vmem, size = 0x2000, scoped, tag = 'input window, operand 0']
    #allocation3 [shape = 's32[2]{0}', space=sflag, size = 0x8, scoped, tag = 'scoped memory for tpu_custom_call.1']
    #allocation4 [shape = 's32[2]{0}', space=sflag, size = 0x8, scoped, tag = 'scoped memory for tpu_custom_call.1']
    #allocation5 [shape = 'u8[131072]{0}', space=vmem, size = 0x20000, scoped, tag = 'input window, operand 1, single buffered']
    #allocation6 [shape = 's32[1]{0}', space=sflag, size = 0x4, scoped, tag = 'scoped memory for tpu_custom_call.1']
    #allocation7 [shape = 'u8[32768]{0}', space=vmem, size = 0x8000, scoped, tag = 'output window, operand 0']
    %8 = vsyncpa [#allocation3], 0
    %s9 = scalar_lea.sflag [#allocation3], 1
    %10 = vsyncpa %s9, 0
    %11 = vsyncpa [#allocation6], 0
    %12 = vsyncpa [#allocation4], 0
    %s13 = scalar_lea.sflag [#allocation4], 1
    %14 = vsyncpa %s13, 0
    loop: start=0, step=1, limit=4
    $region2: #{tpu_custom_call.1} parent=1 // loop_pre_header
      _
    $region3: #{tpu_custom_call.1} parent=1 // loop_header
      %s16 = sphi 0, %s20
      %p17 = scmp.ge.s32.totalorder %s16, 4
      %s26 = sphi 0, %s28
      %s29 = sphi 0, %s26
      %s30 = sphi 0, %s29
      %s46 = sphi 0, %s30
      %s50 = sphi 0, %s50
      %s52 = sphi 0, %s50
      %s53 = sphi 0, %s52
      %s67 = sphi 0, %s53
      %s71 = sphi 0, %s71
      %s73 = sphi 0, %s71
      %s74 = sphi 0, %s73
      %s88 = sphi 0, %s74
      %s94 = sphi 0, %s96
      %s97 = sphi 0, %s94
      %s98 = sphi 0, %s97
      %s114 = sphi 0, %s98
    $region4: #{tpu_custom_call.1} parent=1 // loop_header_branch
      %19 = sbr.rel (%p17) target = $region8
    $region5: #{tpu_custom_call.1} parent=1 // loop_body
      %s21 = ssub.s32 %s16, 1
      %s22 = ssub.s32 %s16, 2
      %s23 = sadd.s32 %s16, 1
      %s24 = ssub.s32 %s16, %s23
      %p25 = scmp.eq.s32.totalorder %s24, 0
      %s27 = sadd.s32 %s26, 1
      %s28 = scalar_select %p25, %s26, %s27
      %p31 = pneg %p25
      %p32 = scmp.eq.s32.totalorder %s16, 1
      %p33 = por %p31, %p32
      %p34 = scmp.ne.s32.totalorder %s26, %s29
      %p35 = scmp.eq.s32.totalorder %s16, 0
      %p36 = por %p34, %p35
      %p37 = scmp.ne.s32.totalorder %s26, %s29
      %p38 = scmp.eq.s32.totalorder %s21, 1
      %p39 = por %p37, %p38
      %p40 = scmp.ne.s32.totalorder %s29, %s30
      %p41 = scmp.eq.s32.totalorder %s21, 0
      %p42 = por %p40, %p41
      %p43 = scmp.ne.s32.totalorder %s29, %s30
      %p44 = scmp.eq.s32.totalorder %s22, 1
      %p45 = por %p43, %p44
      %p47 = scmp.ne.s32.totalorder %s30, %s46
      %p48 = scmp.eq.s32.totalorder %s22, 0
      %p49 = por %p47, %p48
      %s51 = sadd.s32 %s50, 1
      %p54 = scmp.eq.s32.totalorder %s16, 1
      %p55 = scmp.ne.s32.totalorder %s50, %s52
      %p56 = scmp.eq.s32.totalorder %s16, 0
      %p57 = por %p55, %p56
      %p58 = scmp.ne.s32.totalorder %s50, %s52
      %p59 = scmp.eq.s32.totalorder %s21, 1
      %p60 = por %p58, %p59
      %p61 = scmp.ne.s32.totalorder %s52, %s53
      %p62 = scmp.eq.s32.totalorder %s21, 0
      %p63 = por %p61, %p62
      %p64 = scmp.ne.s32.totalorder %s52, %s53
      %p65 = scmp.eq.s32.totalorder %s22, 1
      %p66 = por %p64, %p65
      %p68 = scmp.ne.s32.totalorder %s53, %s67
      %p69 = scmp.eq.s32.totalorder %s22, 0
      %p70 = por %p68, %p69
      %s72 = sadd.s32 %s71, 1
      %p75 = scmp.eq.s32.totalorder %s16, 1
      %p76 = scmp.ne.s32.totalorder %s71, %s73
      %p77 = scmp.eq.s32.totalorder %s16, 0
      %p78 = por %p76, %p77
      %p79 = scmp.ne.s32.totalorder %s71, %s73
      %p80 = scmp.eq.s32.totalorder %s21, 1
      %p81 = por %p79, %p80
      %p82 = scmp.ne.s32.totalorder %s73, %s74
      %p83 = scmp.eq.s32.totalorder %s21, 0
      %p84 = por %p82, %p83
      %p85 = scmp.ne.s32.totalorder %s73, %s74
      %p86 = scmp.eq.s32.totalorder %s22, 1
      %p87 = por %p85, %p86
      %p89 = scmp.ne.s32.totalorder %s74, %s88
      %p90 = scmp.eq.s32.totalorder %s22, 0
      %p91 = por %p89, %p90
      %s92 = ssub.s32 %s16, %s23
      %p93 = scmp.eq.s32.totalorder %s92, 0
      %s95 = sadd.s32 %s94, 1
      %s96 = scalar_select %p93, %s94, %s95
      %p99 = pneg %p93
      %p100 = scmp.eq.s32.totalorder %s16, 1
      %p101 = por %p99, %p100
      %p102 = scmp.ne.s32.totalorder %s94, %s97
      %p103 = scmp.eq.s32.totalorder %s16, 0
      %p104 = por %p102, %p103
      %p105 = scmp.ne.s32.totalorder %s94, %s97
      %p106 = scmp.eq.s32.totalorder %s21, 1
      %p107 = por %p105, %p106
      %p108 = scmp.ne.s32.totalorder %s97, %s98
      %p109 = scmp.eq.s32.totalorder %s21, 0
      %p110 = por %p108, %p109
      %p111 = scmp.ne.s32.totalorder %s97, %s98
      %p112 = scmp.eq.s32.totalorder %s22, 1
      %p113 = por %p111, %p112
      %p115 = scmp.ne.s32.totalorder %s98, %s114
      %p116 = scmp.eq.s32.totalorder %s22, 0
      %p117 = por %p115, %p116
      %p118 = scmp.le.s32.totalorder 1, %s16
      %p119 = scmp.lt.s32.totalorder %s16, 3
      %p120 = pnand %p118, %p119
      %p121 = pneg %p120
      // Predicated region
      $region9: #{tpu_custom_call.1} parent=5 // pred_check
        _
      $region10: #{tpu_custom_call.1} parent=5 // pred_check_branch
        %123 = sbr.rel (%p120) target = $region12
      $region11: #{tpu_custom_call.1} parent=5 // pred_region
        %s124 = ssub.s32 %s16, 1
        // Predicated region
        $region13: #{tpu_custom_call.1} parent=11 // pred_check
          %p125 = pneg %p63
        $region14: #{tpu_custom_call.1} parent=11 // pred_check_branch
          %127 = sbr.rel (%p125) target = $region16
        $region15: #{tpu_custom_call.1} parent=11 // pred_region
          %s129 = ssub.s32 4096, 4096
          %130 = vsyncadd [#allocation6], %s129
          %s131 = sshll.u32 [#allocation5], 4
          %s132 = int_to_ptr.vmem [resolvable:$true] %s131
          %137 = dma.hbm_to_vmem [thread:$0]  %s1, 4096, %s132, [#allocation6], 256, 256, 16
        $region16: #{tpu_custom_call.1} parent=11 // pred_fallthru
          _
        // Predicated region
        $region17: #{tpu_custom_call.1} parent=11 // pred_check
          %p138 = pneg %p84
        $region18: #{tpu_custom_call.1} parent=11 // pred_check_branch
          %140 = sbr.rel (%p138) target = $region20
        $region19: #{tpu_custom_call.1} parent=11 // pred_region
          _
        $region20: #{tpu_custom_call.1} parent=11 // pred_fallthru
          _
      $region12: #{tpu_custom_call.1} parent=5 // pred_fallthru
        _
      %p141 = scmp.lt.s32.totalorder %s16, 2
      // Predicated region
      $region21: #{tpu_custom_call.1} parent=5 // pred_check
        %p142 = pneg %p141
      $region22: #{tpu_custom_call.1} parent=5 // pred_check_branch
        %144 = sbr.rel (%p142) target = $region24
      $region23: #{tpu_custom_call.1} parent=5 // pred_region
        // Predicated region
        $region25: #{tpu_custom_call.1} parent=23 // pred_check
          %p145 = pneg %p36
        $region26: #{tpu_custom_call.1} parent=23 // pred_check_branch
          %147 = sbr.rel (%p145) target = $region28
        $region27: #{tpu_custom_call.1} parent=23 // pred_region
          %s148 = sand.u32 %s26, 1
          %s149 = scalar_lea.sflag [#allocation3], %s148
          %s150 = sand.u32 %s26, 1
          %s151 = smul.addr %s150, 8
          %s152 = scalar_lea.vmem [#allocation2], %s151
          %s154 = ssub.s32 128, 128
          %155 = vsyncadd %s149, %s154
          %s156 = smul.addr %s16, 128
          %s157 = scalar_lea.hbm %s0, %s156
          %s159 = sshll.u32 %s152, 4
          %s160 = int_to_ptr.vmem [resolvable:$true] %s159
          %162 = dma.hbm_to_vmem [thread:$0]  %s157, 128, %s160, %s149
        $region28: #{tpu_custom_call.1} parent=23 // pred_fallthru
          _
      $region24: #{tpu_custom_call.1} parent=5 // pred_fallthru
        _
      %p163 = scmp.le.s32.totalorder 1, %s16
      %p164 = scmp.lt.s32.totalorder %s16, 3
      %p165 = pnand %p163, %p164
      %p166 = pneg %p165
      // Predicated region
      $region29: #{tpu_custom_call.1} parent=5 // pred_check
        _
      $region30: #{tpu_custom_call.1} parent=5 // pred_check_branch
        %168 = sbr.rel (%p165) target = $region32
      $region31: #{tpu_custom_call.1} parent=5 // pred_region
        %s169 = ssub.s32 %s16, 1
        %s170 = sand.u32 %s29, 1
        %s171 = scalar_lea.sflag [#allocation3], %s170
        %s172 = sand.u32 %s29, 1
        %s173 = smul.addr %s172, 8
        %s174 = scalar_lea.vmem [#allocation2], %s173
        // Predicated region
        $region33: #{tpu_custom_call.1} parent=31 // pred_check
          %p175 = pneg %p42
        $region34: #{tpu_custom_call.1} parent=31 // pred_check_branch
          %177 = sbr.rel (%p175) target = $region36
        $region35: #{tpu_custom_call.1} parent=31 // pred_region
          %178 = dma.done %s171, 128
        $region36: #{tpu_custom_call.1} parent=31 // pred_fallthru
          _
        // Predicated region
        $region37: #{tpu_custom_call.1} parent=31 // pred_check
          %p179 = pneg %p63
        $region38: #{tpu_custom_call.1} parent=31 // pred_check_branch
          %181 = sbr.rel (%p179) target = $region40
        $region39: #{tpu_custom_call.1} parent=31 // pred_region
          %182 = dma.done [#allocation6], 4096
        $region40: #{tpu_custom_call.1} parent=31 // pred_fallthru
          _
        %s183 = sand.u32 %s29, 1
        %s184 = scalar_lea.sflag [#allocation3], %s183
        %s185 = sand.u32 %s29, 1
        %s186 = smul.addr %s185, 8
        %s187 = scalar_lea.vmem [#allocation2], %s186
        %p188 = pneg %p42
        %p189 = pneg %p39
        %p190 = pneg %p63
        %p191 = pneg %p60
        %p192 = pneg %p84
        %p193 = pneg %p81
        %p194 = pneg %p110
        %p195 = pneg %p107
        %s196 = sand.u32 %s97, 1
        %s197 = scalar_lea.sflag [#allocation4], %s196
        %s198 = sand.u32 %s97, 1
        %s199 = smul.addr %s198, 32
        %s200 = scalar_lea.vmem [#allocation7], %s199
        %v202 = vld [vmem:[%s174] sm:$0xff]
        %v203 = vpack.c.bf16 %v202, %v202
        %v204 = vld [vmem:[#allocation5] sm:$0xff]
        %v205 = vld [vmem:[#allocation5 + $0x8] sm:$0xff]
        %v206 = vld [vmem:[#allocation5 + $0x10] sm:$0xff]
        %v207 = vld [vmem:[#allocation5 + $0x18] sm:$0xff]
        %v208 = vld [vmem:[#allocation5 + $0x20] sm:$0xff]
        %v209 = vld [vmem:[#allocation5 + $0x28] sm:$0xff]
        %v210 = vld [vmem:[#allocation5 + $0x30] sm:$0xff]
        %v211 = vld [vmem:[#allocation5 + $0x38] sm:$0xff]
        %v212 = vld [vmem:[#allocation5 + $0x40] sm:$0xff]
        %v213 = vld [vmem:[#allocation5 + $0x48] sm:$0xff]
        %v214 = vld [vmem:[#allocation5 + $0x50] sm:$0xff]
        %v215 = vld [vmem:[#allocation5 + $0x58] sm:$0xff]
        %v216 = vld [vmem:[#allocation5 + $0x60] sm:$0xff]
        %v217 = vld [vmem:[#allocation5 + $0x68] sm:$0xff]
        %v218 = vld [vmem:[#allocation5 + $0x70] sm:$0xff]
        %v219 = vld [vmem:[#allocation5 + $0x78] sm:$0xff]
        %v220 = vld [vmem:[#allocation5 + $0x80] sm:$0xff]
        %v221 = vld [vmem:[#allocation5 + $0x88] sm:$0xff]
        %v222 = vld [vmem:[#allocation5 + $0x90] sm:$0xff]
        %v223 = vld [vmem:[#allocation5 + $0x98] sm:$0xff]
        %v224 = vld [vmem:[#allocation5 + $0xa0] sm:$0xff]
        %v225 = vld [vmem:[#allocation5 + $0xa8] sm:$0xff]
        %v226 = vld [vmem:[#allocation5 + $0xb0] sm:$0xff]
        %v227 = vld [vmem:[#allocation5 + $0xb8] sm:$0xff]
        %v228 = vld [vmem:[#allocation5 + $0xc0] sm:$0xff]
        %v229 = vld [vmem:[#allocation5 + $0xc8] sm:$0xff]
        %v230 = vld [vmem:[#allocation5 + $0xd0] sm:$0xff]
        %v231 = vld [vmem:[#allocation5 + $0xd8] sm:$0xff]
        %v232 = vld [vmem:[#allocation5 + $0xe0] sm:$0xff]
        %v233 = vld [vmem:[#allocation5 + $0xe8] sm:$0xff]
        %v234 = vld [vmem:[#allocation5 + $0xf0] sm:$0xff]
        %v235 = vld [vmem:[#allocation5 + $0xf8] sm:$0xff]
        %v236 = vld [vmem:[%s2] sm:$0xf]
        %v238 = vlaneseq
        %v239 = vshrl.u32 %v238, 7
        %v240 = vsub.s32 0, %v239
        %v241 = vrot.slane %v236, %v240
        %v242 = vlaneseq
        %v243 = vshrl.u32 %v242, 7
        %v244 = vsub.s32 1, %v243
        %v245 = vrot.slane %v236, %v244
        %v246 = vlaneseq
        %v247 = vshrl.u32 %v246, 7
        %v248 = vsub.s32 2, %v247
        %v249 = vrot.slane %v236, %v248
        %v250 = vlaneseq
        %v251 = vshrl.u32 %v250, 7
        %v252 = vsub.s32 3, %v251
        %v253 = vrot.slane %v236, %v252
        %v290 = vunpack.c.l.b16 %v204
        %v291 = vunpack.c.h.b16 %v204
        %v292 = vunpack.c.l.b16 %v205
        %v293 = vunpack.c.h.b16 %v205
        %v294 = vunpack.c.l.b16 %v206
        %v295 = vunpack.c.h.b16 %v206
        %v296 = vunpack.c.l.b16 %v207
        %v297 = vunpack.c.h.b16 %v207
        %v298 = vunpack.c.l.b16 %v208
        %v299 = vunpack.c.h.b16 %v208
        %v300 = vunpack.c.l.b16 %v209
        %v301 = vunpack.c.h.b16 %v209
        %v302 = vunpack.c.l.b16 %v210
        %v303 = vunpack.c.h.b16 %v210
        %v304 = vunpack.c.l.b16 %v211
        %v305 = vunpack.c.h.b16 %v211
        %v306 = vunpack.c.l.b16 %v212
        %v307 = vunpack.c.h.b16 %v212
        %v308 = vunpack.c.l.b16 %v213
        %v309 = vunpack.c.h.b16 %v213
        %v310 = vunpack.c.l.b16 %v214
        %v311 = vunpack.c.h.b16 %v214
        %v312 = vunpack.c.l.b16 %v215
        %v313 = vunpack.c.h.b16 %v215
        %v314 = vunpack.c.l.b16 %v216
        %v315 = vunpack.c.h.b16 %v216
        %v316 = vunpack.c.l.b16 %v217
        %v317 = vunpack.c.h.b16 %v217
        %v318 = vunpack.c.l.b16 %v218
        %v319 = vunpack.c.h.b16 %v218
        %v320 = vunpack.c.l.b16 %v219
        %v321 = vunpack.c.h.b16 %v219
        %v322 = vunpack.c.l.b16 %v220
        %v323 = vunpack.c.h.b16 %v220
        %v324 = vunpack.c.l.b16 %v221
        %v325 = vunpack.c.h.b16 %v221
        %v326 = vunpack.c.l.b16 %v222
        %v327 = vunpack.c.h.b16 %v222
        %v328 = vunpack.c.l.b16 %v223
        %v329 = vunpack.c.h.b16 %v223
        %v330 = vunpack.c.l.b16 %v224
        %v331 = vunpack.c.h.b16 %v224
        %v332 = vunpack.c.l.b16 %v225
        %v333 = vunpack.c.h.b16 %v225
        %v334 = vunpack.c.l.b16 %v226
        %v335 = vunpack.c.h.b16 %v226
        %v336 = vunpack.c.l.b16 %v227
        %v337 = vunpack.c.h.b16 %v227
        %v338 = vunpack.c.l.b16 %v228
        %v339 = vunpack.c.h.b16 %v228
        %v340 = vunpack.c.l.b16 %v229
        %v341 = vunpack.c.h.b16 %v229
        %v342 = vunpack.c.l.b16 %v230
        %v343 = vunpack.c.h.b16 %v230
        %v344 = vunpack.c.l.b16 %v231
        %v345 = vunpack.c.h.b16 %v231
        %v346 = vunpack.c.l.b16 %v232
        %v347 = vunpack.c.h.b16 %v232
        %v348 = vunpack.c.l.b16 %v233
        %v349 = vunpack.c.h.b16 %v233
        %v350 = vunpack.c.l.b16 %v234
        %v351 = vunpack.c.h.b16 %v234
        %v352 = vunpack.c.l.b16 %v235
        %v353 = vunpack.c.h.b16 %v235
        %v354 = vpack.c.b16 %v294, %v290
        %v355 = vpack.c.b16 %v295, %v291
        %v356 = vpack.c.b16 %v296, %v292
        %v357 = vpack.c.b16 %v297, %v293
        %v358 = vpack.c.b16 %v302, %v298
        %v359 = vpack.c.b16 %v303, %v299
        %v360 = vpack.c.b16 %v304, %v300
        %v361 = vpack.c.b16 %v305, %v301
        %v362 = vpack.c.b16 %v310, %v306
        %v363 = vpack.c.b16 %v311, %v307
        %v364 = vpack.c.b16 %v312, %v308
        %v365 = vpack.c.b16 %v313, %v309
        %v366 = vpack.c.b16 %v318, %v314
        %v367 = vpack.c.b16 %v319, %v315
        %v368 = vpack.c.b16 %v320, %v316
        %v369 = vpack.c.b16 %v321, %v317
        %v370 = vpack.c.b16 %v326, %v322
        %v371 = vpack.c.b16 %v327, %v323
        %v372 = vpack.c.b16 %v328, %v324
        %v373 = vpack.c.b16 %v329, %v325
        %v374 = vpack.c.b16 %v334, %v330
        %v375 = vpack.c.b16 %v335, %v331
        %v376 = vpack.c.b16 %v336, %v332
        %v377 = vpack.c.b16 %v337, %v333
        %v378 = vpack.c.b16 %v342, %v338
        %v379 = vpack.c.b16 %v343, %v339
        %v380 = vpack.c.b16 %v344, %v340
        %v381 = vpack.c.b16 %v345, %v341
        %v382 = vpack.c.b16 %v350, %v346
        %v383 = vpack.c.b16 %v351, %v347
        %v384 = vpack.c.b16 %v352, %v348
        %v385 = vpack.c.b16 %v353, %v349
        %418 = vmatprep.subr.bf16.mxu0 %v355
        %419 = vmatpush1.bf16.msra.mxu0 %v354
        %420 = vmatprep.subr.bf16.mxu0 %v359
        %421 = vmatpush1.bf16.msra.mxu0 %v358
        %422 = vmatprep.subr.bf16.mxu0 %v363
        %423 = vmatpush1.bf16.msra.mxu0 %v362
        %424 = vmatprep.subr.bf16.mxu0 %v367
        %425 = vmatpush1.bf16.msra.mxu0 %v366
        %426 = vmatprep.subr.bf16.mxu0 %v371
        %427 = vmatpush1.bf16.msra.mxu0 %v370
        %428 = vmatprep.subr.bf16.mxu0 %v375
        %429 = vmatpush1.bf16.msra.mxu0 %v374
        %430 = vmatprep.subr.bf16.mxu0 %v379
        %431 = vmatpush1.bf16.msra.mxu0 %v378
        %432 = vmatprep.subr.bf16.mxu0 %v383
        %433 = vmatpush1.bf16.msra.mxu0 %v382
        %434 = vmatprep.subr.bf16.mxu0 0
        %435 = vmatpush1.bf16.msra.mxu0 0
        %436 = vmatprep.subr.bf16.mxu0 0
        %437 = vmatpush1.bf16.msra.mxu0 0
        %438 = vmatprep.subr.bf16.mxu0 0
        %439 = vmatpush1.bf16.msra.mxu0 0
        %440 = vmatprep.subr.bf16.mxu0 0
        %441 = vmatpush1.bf16.msra.mxu0 0
        %442 = vmatprep.subr.bf16.mxu0 0
        %443 = vmatpush1.bf16.msra.mxu0 0
        %444 = vmatprep.subr.bf16.mxu0 0
        %445 = vmatpush1.bf16.msra.mxu0 0
        %446 = vmatprep.subr.bf16.mxu0 0
        %447 = vmatpush1.bf16.msra.mxu0 0
        %448 = vmatprep.subr.bf16.mxu0 0
        %449 = vmatpush1.bf16.msra.mxu0 0
        %450 = vmatprep.mubr.bf16.mxu0 0
        %451 = vmatmul.mubr.bf16.gmra.mrb[0].mxu0 %v203
        %v452 = vpop.f32.mrb[0].mxu0
        %v453 = vadd.f32 %v241, %v452
        %v454 = vpop.f32.mrb[0].mxu0
        %v455 = vadd.f32 %v245, %v454
        %v456 = vpop.f32.mrb[0].mxu0
        %v457 = vpop.f32.mrb[0].mxu0
        %458 = vdwg.mxu0
        %459 = vmatprep.subr.bf16.mxu0 %v357
        %460 = vmatpush1.bf16.msra.mxu0 %v356
        %461 = vmatprep.subr.bf16.mxu0 %v361
        %462 = vmatpush1.bf16.msra.mxu0 %v360
        %463 = vmatprep.subr.bf16.mxu0 %v365
        %464 = vmatpush1.bf16.msra.mxu0 %v364
        %465 = vmatprep.subr.bf16.mxu0 %v369
        %466 = vmatpush1.bf16.msra.mxu0 %v368
        %467 = vmatprep.subr.bf16.mxu0 %v373
        %468 = vmatpush1.bf16.msra.mxu0 %v372
        %469 = vmatprep.subr.bf16.mxu0 %v377
        %470 = vmatpush1.bf16.msra.mxu0 %v376
        %471 = vmatprep.subr.bf16.mxu0 %v381
        %472 = vmatpush1.bf16.msra.mxu0 %v380
        %473 = vmatprep.subr.bf16.mxu0 %v385
        %474 = vmatpush1.bf16.msra.mxu0 %v384
        %475 = vmatprep.subr.bf16.mxu0 0
        %476 = vmatpush1.bf16.msra.mxu0 0
        %477 = vmatprep.subr.bf16.mxu0 0
        %478 = vmatpush1.bf16.msra.mxu0 0
        %479 = vmatprep.subr.bf16.mxu0 0
        %480 = vmatpush1.bf16.msra.mxu0 0
        %481 = vmatprep.subr.bf16.mxu0 0
        %482 = vmatpush1.bf16.msra.mxu0 0
        %483 = vmatprep.subr.bf16.mxu0 0
        %484 = vmatpush1.bf16.msra.mxu0 0
        %485 = vmatprep.subr.bf16.mxu0 0
        %486 = vmatpush1.bf16.msra.mxu0 0
        %487 = vmatprep.subr.bf16.mxu0 0
        %488 = vmatpush1.bf16.msra.mxu0 0
        %489 = vmatprep.subr.bf16.mxu0 0
        %490 = vmatpush1.bf16.msra.mxu0 0
        %491 = vmatprep.mubr.bf16.mxu0 0
        %492 = vmatmul.mubr.bf16.gmra.mrb[0].mxu0 %v203
        %v493 = vpop.f32.mrb[0].mxu0
        %v494 = vadd.f32 %v249, %v493
        %v495 = vpop.f32.mrb[0].mxu0
        %v496 = vadd.f32 %v253, %v495
        %v497 = vpop.f32.mrb[0].mxu0
        %v498 = vpop.f32.mrb[0].mxu0
        %499 = vdwg.mxu0
        %v500 = vmul.f32 %v453, 0.5
        %v501 = vmul.f32 %v455, 0.5
        %v502 = vmul.f32 %v494, 0.5
        %v503 = vmul.f32 %v496, 0.5
        %v504 = vmul.f32 %v453, 0.70710677
        %v505 = vmul.f32 %v455, 0.70710677
        %v506 = vmul.f32 %v494, 0.70710677
        %v507 = vmul.f32 %v496, 0.70710677
        %v508 = verf.f32.pop %v504
        %v509 = verf.f32.pop %v505
        %v510 = verf.f32.pop %v506
        %v511 = verf.f32.pop %v507
        %v512 = vadd.f32 %v508, 1.0
        %v513 = vadd.f32 %v509, 1.0
        %v514 = vadd.f32 %v510, 1.0
        %v515 = vadd.f32 %v511, 1.0
        %v516 = vmul.f32 %v500, %v512
        %v517 = vmul.f32 %v501, %v513
        %v518 = vmul.f32 %v502, %v514
        %v519 = vmul.f32 %v503, %v515
        %520 = vst [vmem:[%s200] sm:$0xff] %v516
        %521 = vst [vmem:[%s200 + $0x8] sm:$0xff] %v517
        %522 = vst [vmem:[%s200 + $0x10] sm:$0xff] %v518
        %523 = vst [vmem:[%s200 + $0x18] sm:$0xff] %v519
        %s524 = sand.u32 %s97, 1
        %s525 = scalar_lea.sflag [#allocation4], %s524
        %s526 = sand.u32 %s97, 1
        %s527 = smul.addr %s526, 32
        %s528 = scalar_lea.vmem [#allocation7], %s527
        // Predicated region
        $region41: #{tpu_custom_call.1} parent=31 // pred_check
          %p529 = pneg %p107
        $region42: #{tpu_custom_call.1} parent=31 // pred_check_branch
          %531 = sbr.rel (%p529) target = $region44
        $region43: #{tpu_custom_call.1} parent=31 // pred_region
          %s533 = ssub.s32 512, 512
          %534 = vsyncadd %s525, %s533
          %s535 = smul.addr %s21, 4
          %s536 = smul.addr %s535, 128
          %s537 = scalar_lea.hbm %s3, %s536
          %s539 = sshll.u32 %s528, 4
          %s540 = int_to_ptr.vmem [resolvable:$true] %s539
          %542 = dma.vmem_to_hbm [thread:$0]  %s540, 512, %s537, %s525
        $region44: #{tpu_custom_call.1} parent=31 // pred_fallthru
          _
      $region32: #{tpu_custom_call.1} parent=5 // pred_fallthru
        _
      %p543 = scmp.le.s32.totalorder 2, %s16
      // Predicated region
      $region45: #{tpu_custom_call.1} parent=5 // pred_check
        %p544 = pneg %p543
      $region46: #{tpu_custom_call.1} parent=5 // pred_check_branch
        %546 = sbr.rel (%p544) target = $region48
      $region47: #{tpu_custom_call.1} parent=5 // pred_region
        %s547 = ssub.s32 %s16, 2
        // Predicated region
        $region49: #{tpu_custom_call.1} parent=47 // pred_check
          %p548 = pneg %p113
        $region50: #{tpu_custom_call.1} parent=47 // pred_check_branch
          %550 = sbr.rel (%p548) target = $region52
        $region51: #{tpu_custom_call.1} parent=47 // pred_region
          %s551 = sand.u32 %s98, 1
          %s552 = scalar_lea.sflag [#allocation4], %s551
          %s553 = sand.u32 %s98, 1
          %s554 = smul.addr %s553, 32
          %s555 = scalar_lea.vmem [#allocation7], %s554
          %556 = dma.done %s552, 512
        $region52: #{tpu_custom_call.1} parent=47 // pred_fallthru
          _
      $region48: #{tpu_custom_call.1} parent=5 // pred_fallthru
        _
    $region6: #{tpu_custom_call.1} parent=1 // loop_footer
      %s20 = sadd.s32 1, %s16
    $region7: #{tpu_custom_call.1} parent=1 // loop_footer_branch
      %15 = sbr.rel target = $region3
    $region8: #{tpu_custom_call.1} parent=1 // loop_exit
      _
    %557 = vsyncpa [#allocation3], 1
    %s558 = scalar_lea.sflag [#allocation3], 1
    %559 = vsyncpa %s558, 1
    %560 = vsyncpa [#allocation6], 1
    %561 = vsyncpa [#allocation4], 1
    %s562 = scalar_lea.sflag [#allocation4], 1
    %563 = vsyncpa %s562, 1

</llo_original>
